<compile_context>
chip_gen: v7x
topology: tpu7x:2x2x1
jax: 0.10.0
libtpu: 0.0.40
codegen_flags: <defaults>
</compile_context>

<pallas_src>
import functools

import jax
import jax.numpy as jnp
from jax.experimental import pallas as pl
from jax.experimental.pallas import tpu as pltpu

N_EMBED = 32      # C
HEAD_SIZE = 16    # H
BLOCK_SIZE = 8    # T (causal mask size)
DROPOUT = 0.0     # dropout is identity in eval mode


def _head_kernel(x_ref, w_ref, o_ref, *, batch_block, seq_len, n_embed,
                 head_size, scale, matmul_dtype):
    """One grid step processes `batch_block` sequences.

    x_ref : (batch_block, T, C)
    w_ref : (3, C, H)   stacked [key, query, value] projections
    o_ref : (batch_block, T, H)
    """
    bb, T, C, H = batch_block, seq_len, n_embed, head_size

    # --- QKV projection on the folded (bb*T, C) slab -----------------------
    # T == 8 matches the sublane tile, so this reshape is a relabel, not a
    # copy.  Matmul operands go to bf16 (MXU-native); accumulate in f32.
    x = x_ref[...].reshape(bb * T, C).astype(matmul_dtype)          # (M, C)

    k = jnp.dot(x, w_ref[0].astype(matmul_dtype),
                preferred_element_type=jnp.float32)                 # (M, H) f32
    q = jnp.dot(x, w_ref[1].astype(matmul_dtype),
                preferred_element_type=jnp.float32)                 # (M, H) f32
    v = jnp.dot(x, w_ref[2].astype(matmul_dtype),
                preferred_element_type=jnp.float32)                 # (M, H) f32

    # --- Batched (bb, T, T) attention --------------------------------------
    # NOTE: the reference module scales by C**-0.5 (n_embed), NOT the usual
    # head_size**-0.5 — intentional, matches the PyTorch forward.
    kb = k.reshape(bb, T, H).astype(matmul_dtype)
    qb = (q * jnp.float32(scale)).reshape(bb, T, H).astype(matmul_dtype)
    vb = v.reshape(bb, T, H).astype(matmul_dtype)

    s = jnp.einsum('bqd,bkd->bqk', qb, kb,
                   preferred_element_type=jnp.float32)              # (bb, T, T)

    # Causal mask on one (T, T) tile, broadcast over the batch.  Finite
    # -1e30 instead of -inf; every row keeps at least its diagonal entry, so
    # max-subtracted softmax below is safe.
    row = jax.lax.broadcasted_iota(jnp.int32, (T, T), 0)
    col = jax.lax.broadcasted_iota(jnp.int32, (T, T), 1)
    s = jnp.where((col <= row)[None, :, :], s, jnp.float32(-1e30))

    # Numerically stable softmax along the last axis.  Elementwise math in
    # f32; denominator reciprocal goes to the EUP (separate bundle slot).
    m = jnp.max(s, axis=-1, keepdims=True)
    e = jnp.exp(s - m)
    denom = jnp.sum(e, axis=-1, keepdims=True)
    p = e * pl.reciprocal(denom, approx=True)                       # (bb, T, T)

    # Dropout(p) is identity here (dropout = 0.0 / eval mode).
    out = jnp.einsum('bqk,bkd->bqd', p.astype(matmul_dtype), vb,
                     preferred_element_type=jnp.float32)            # (bb, T, H)
    o_ref[...] = out.astype(o_ref.dtype)


def _pick_batch_block(B, T):
    """Divisor of B giving >=2 grid steps (when B>=2) and ~512 rows/step."""
    cap = max(1, 512 // T)           # target ~512 matmul rows per grid step
    if B >= 2:
        cap = max(1, min(cap, B // 2))   # >= 2 steps -> v7x 2-TC sharding
    bb = 1
    for d in range(1, min(B, cap) + 1):
        if B % d == 0:
            bb = d
    return bb


def head_forward(x, w_key, w_query, w_value, *, batch_block=None,
                 matmul_dtype=jnp.bfloat16):
    """x: (B, T, C); w_*: (C, head_size). Returns (B, T, head_size)."""
    B, T, C = x.shape
    H = w_key.shape[1]

    if batch_block is None:
        batch_block = _pick_batch_block(B, T)
    assert B % batch_block == 0, "batch_block must divide B"

    # Stacked weights: (3, C, H).  Indexed on the leading axis in-kernel, so
    # each projection result is a clean (M, H) slab (no 16-lane slicing).
    w = jnp.stack([w_key, w_query, w_value], axis=0)

    kernel = functools.partial(
        _head_kernel, batch_block=batch_block, seq_len=T, n_embed=C,
        head_size=H, scale=C ** -0.5, matmul_dtype=matmul_dtype)

    out = pl.pallas_call(
        kernel,
        out_shape=jax.ShapeDtypeStruct((B, T, H), x.dtype),
        grid_spec=pltpu.PrefetchScalarGridSpec(
            num_scalar_prefetch=0,
            grid=(B // batch_block,),
            in_specs=[
                pl.BlockSpec((batch_block, T, C), lambda i: (i, 0, 0)),  # x tile
                pl.BlockSpec((3, C, H), lambda i: (0, 0, 0)),            # weights (resident)
            ],
            out_specs=pl.BlockSpec((batch_block, T, H), lambda i: (i, 0, 0)),
        ),
        compiler_params=pltpu.CompilerParams(
            dimension_semantics=("parallel",)),
    )(x, w)

    return out


def head_reference(x, w_key, w_query, w_value):
    """Pure-JAX reference mirroring the PyTorch forward (f32, exact softmax)."""
    B, T, C = x.shape
    k = x @ w_key
    q = x @ w_query
    v = x @ w_value
    wei = (q @ jnp.swapaxes(k, -2, -1)) * (C ** -0.5)
    tril = jnp.tril(jnp.ones((T, T), dtype=bool))
    wei = jnp.where(tril, wei, -jnp.inf)
    wei = jax.nn.softmax(wei, axis=-1)
    return wei @ v


if __name__ == "__main__":
    key = jax.random.PRNGKey(0)
    kx, kk, kq, kv = jax.random.split(key, 4)

    B, T, C, H = 2, BLOCK_SIZE, N_EMBED, HEAD_SIZE

    x = jax.random.normal(kx, (B, T, C), dtype=jnp.float32)
    # deterministic weight init (nn.Linear-style uniform(-1/sqrt(C), 1/sqrt(C)))
    bound = 1.0 / (C ** 0.5)
    w_key = jax.random.uniform(kk, (C, H), jnp.float32, -bound, bound)
    w_query = jax.random.uniform(kq, (C, H), jnp.float32, -bound, bound)
    w_value = jax.random.uniform(kv, (C, H), jnp.float32, -bound, bound)

    out = head_forward(x, w_key, w_query, w_value)
    out = jax.block_until_ready(out)

    ref = head_reference(x, w_key, w_query, w_value)
    assert out.shape == (B, T, H)
    # Tolerance 2e-2: matmul operands are bf16 (MXU-native) and the softmax
    # denominator uses the EUP approx reciprocal.
    assert jnp.allclose(out, ref, atol=2e-2, rtol=2e-2), "mismatch vs reference"

    print("KERNEL_OK")
</pallas_src>

<mosaic_0001>
module attributes {stable_mosaic.version = 11 : i64} {
  func.func @_head_kernel(%arg0: i32, %arg1: memref<1x8x32xf32, #tpu.memory_space<vmem>>, %arg2: memref<3x32x16xf32, #tpu.memory_space<vmem>>, %arg3: memref<1x8x16xf32, #tpu.memory_space<vmem>>) attributes {dimension_semantics = [#tpu.dimension_semantics<parallel>], iteration_bounds = array<i64: 2>, scalar_prefetch = 0 : i64, scratch_operands = 0 : i64, tpu.core_type = #tpu.core_type<tc>, window_params = [{transform_indices = @transform_0, window_bounds = array<i64: 1, 8, 32>}, {pipeline_mode = #tpu.pipeline_mode<synchronous>, transform_indices = @transform_1, window_bounds = array<i64: 3, 32, 16>}, {transform_indices = @transform_2, window_bounds = array<i64: 1, 8, 16>}]} {
    %c0 = arith.constant 0 : index
    %c0_0 = arith.constant 0 : index
    %c0_1 = arith.constant 0 : index
    %0 = vector.load %arg1[%c0, %c0_0, %c0_1] : memref<1x8x32xf32, #tpu.memory_space<vmem>>, vector<1x8x32xf32>
    %1 = vector.shape_cast %0 : vector<1x8x32xf32> to vector<8x32xf32>
    %2 = arith.truncf %1 : vector<8x32xf32> to vector<8x32xbf16>
    %c0_2 = arith.constant 0 : index
    %c0_3 = arith.constant 0 : index
    %c0_4 = arith.constant 0 : index
    %3 = vector.load %arg2[%c0_2, %c0_3, %c0_4] : memref<3x32x16xf32, #tpu.memory_space<vmem>>, vector<1x32x16xf32>
    %4 = vector.shape_cast %3 : vector<1x32x16xf32> to vector<32x16xf32>
    %5 = arith.truncf %4 : vector<32x16xf32> to vector<32x16xbf16>
    %cst = arith.constant dense<0.000000e+00> : vector<8x16xf32>
    %6 = tpu.matmul %2, %5, %cst {dimension_numbers = #tpu.dot_dimension_numbers<[1], [0], [0], [1], [0, 0, 1, 1], [], []>} : vector<8x32xbf16>, vector<32x16xbf16>, vector<8x16xf32> -> vector<8x16xf32>
    %c1 = arith.constant 1 : index
    %c0_5 = arith.constant 0 : index
    %c0_6 = arith.constant 0 : index
    %7 = vector.load %arg2[%c1, %c0_5, %c0_6] : memref<3x32x16xf32, #tpu.memory_space<vmem>>, vector<1x32x16xf32>
    %8 = vector.shape_cast %7 : vector<1x32x16xf32> to vector<32x16xf32>
    %9 = arith.truncf %8 : vector<32x16xf32> to vector<32x16xbf16>
    %cst_7 = arith.constant dense<0.000000e+00> : vector<8x16xf32>
    %10 = tpu.matmul %2, %9, %cst_7 {dimension_numbers = #tpu.dot_dimension_numbers<[1], [0], [0], [1], [0, 0, 1, 1], [], []>} : vector<8x32xbf16>, vector<32x16xbf16>, vector<8x16xf32> -> vector<8x16xf32>
    %c2 = arith.constant 2 : index
    %c0_8 = arith.constant 0 : index
    %c0_9 = arith.constant 0 : index
    %11 = vector.load %arg2[%c2, %c0_8, %c0_9] : memref<3x32x16xf32, #tpu.memory_space<vmem>>, vector<1x32x16xf32>
    %12 = vector.shape_cast %11 : vector<1x32x16xf32> to vector<32x16xf32>
    %13 = arith.truncf %12 : vector<32x16xf32> to vector<32x16xbf16>
    %cst_10 = arith.constant dense<0.000000e+00> : vector<8x16xf32>
    %14 = tpu.matmul %2, %13, %cst_10 {dimension_numbers = #tpu.dot_dimension_numbers<[1], [0], [0], [1], [0, 0, 1, 1], [], []>} : vector<8x32xbf16>, vector<32x16xbf16>, vector<8x16xf32> -> vector<8x16xf32>
    %15 = vector.shape_cast %6 : vector<8x16xf32> to vector<1x8x16xf32>
    %16 = arith.truncf %15 : vector<1x8x16xf32> to vector<1x8x16xbf16>
    %cst_11 = arith.constant 0.176776692 : f32
    %17 = vector.broadcast %cst_11 : f32 to vector<8x16xf32>
    %18 = arith.mulf %10, %17 : vector<8x16xf32>
    %19 = vector.shape_cast %18 : vector<8x16xf32> to vector<1x8x16xf32>
    %20 = arith.truncf %19 : vector<1x8x16xf32> to vector<1x8x16xbf16>
    %21 = vector.shape_cast %14 : vector<8x16xf32> to vector<1x8x16xf32>
    %22 = arith.truncf %21 : vector<1x8x16xf32> to vector<1x8x16xbf16>
    "tpu.trace_start"() <{level = 10 : i32, message = "bqd,bkd->bqk"}> : () -> ()
    %cst_12 = arith.constant dense<0.000000e+00> : vector<1x8x8xf32>
    %23 = tpu.matmul %20, %16, %cst_12 {dimension_numbers = #tpu.dot_dimension_numbers<[2], [2], [1], [1], [0, 0, 0, 1, 1, 1], [0], [0]>} : vector<1x8x16xbf16>, vector<1x8x16xbf16>, vector<1x8x8xf32> -> vector<1x8x8xf32>
    "tpu.trace_stop"() : () -> ()
    %24 = tpu.iota {dimensions = array<i32: 0>} : vector<8x8xi32>
    %25 = tpu.iota {dimensions = array<i32: 1>} : vector<8x8xi32>
    %26 = arith.cmpi sle, %25, %24 : vector<8x8xi32>
    %27 = vector.shape_cast %26 : vector<8x8xi1> to vector<1x8x8xi1>
    %cst_13 = arith.constant -1.000000e+30 : f32
    %28 = vector.broadcast %cst_13 : f32 to vector<1x8x8xf32>
    %29 = arith.select %27, %23, %28 : vector<1x8x8xi1>, vector<1x8x8xf32>
    %cst_14 = arith.constant dense<0xFF800000> : vector<1x8xf32>
    %30 = vector.multi_reduction <maximumf>, %29, %cst_14 [2] : vector<1x8x8xf32> to vector<1x8xf32>
    %31 = vector.shape_cast %30 : vector<1x8xf32> to vector<1x8x1xf32>
    %32 = vector.broadcast %31 : vector<1x8x1xf32> to vector<1x8x8xf32>
    %33 = arith.subf %29, %32 : vector<1x8x8xf32>
    %34 = math.exp %33 : vector<1x8x8xf32>
    %cst_15 = arith.constant dense<0.000000e+00> : vector<1x8xf32>
    %35 = vector.multi_reduction <add>, %34, %cst_15 [2] : vector<1x8x8xf32> to vector<1x8xf32>
    %36 = vector.shape_cast %35 : vector<1x8xf32> to vector<1x8x1xf32>
    %37 = tpu.reciprocal %36 {approx = true} : vector<1x8x1xf32> -> vector<1x8x1xf32>
    %38 = vector.broadcast %37 : vector<1x8x1xf32> to vector<1x8x8xf32>
    %39 = arith.mulf %34, %38 : vector<1x8x8xf32>
    %40 = arith.truncf %39 : vector<1x8x8xf32> to vector<1x8x8xbf16>
    "tpu.trace_start"() <{level = 10 : i32, message = "bqk,bkd->bqd"}> : () -> ()
    %cst_16 = arith.constant dense<0.000000e+00> : vector<1x8x16xf32>
    %41 = tpu.matmul %40, %22, %cst_16 {dimension_numbers = #tpu.dot_dimension_numbers<[2], [1], [1], [2], [0, 0, 0, 1, 1, 2], [0], [0]>} : vector<1x8x8xbf16>, vector<1x8x16xbf16>, vector<1x8x16xf32> -> vector<1x8x16xf32>
    "tpu.trace_stop"() : () -> ()
    %c0_17 = arith.constant 0 : index
    %c0_18 = arith.constant 0 : index
    %c0_19 = arith.constant 0 : index
    %42 = vector.load %arg3[%c0_17, %c0_18, %c0_19] : memref<1x8x16xf32, #tpu.memory_space<vmem>>, vector<1x8x16xf32>
    tpu.vector_store %arg3[%c0_17, %c0_18, %c0_19], %41 {strides = array<i32>} : memref<1x8x16xf32, #tpu.memory_space<vmem>>, vector<1x8x16xf32>,
    return
  }
  func.func @transform_0(%arg0: i32) -> (i32, i32, i32) {
    %c0_i32 = arith.constant 0 : i32
    %c0_i32_0 = arith.constant 0 : i32
    %c0_i32_1 = arith.constant 0 : i32
    return %arg0, %c0_i32, %c0_i32_0 : i32, i32, i32
  }
  func.func @transform_1(%arg0: i32) -> (i32, i32, i32) {
    %c0_i32 = arith.constant 0 : i32
    %c0_i32_0 = arith.constant 0 : i32
    %c0_i32_1 = arith.constant 0 : i32
    %c0_i32_2 = arith.constant 0 : i32
    return %c0_i32, %c0_i32_0, %c0_i32_1 : i32, i32, i32
  }
  func.func @transform_2(%arg0: i32) -> (i32, i32, i32) {
    %c0_i32 = arith.constant 0 : i32
    %c0_i32_0 = arith.constant 0 : i32
    %c0_i32_1 = arith.constant 0 : i32
    return %arg0, %c0_i32, %c0_i32_0 : i32, i32, i32
  }
}

</mosaic_0001>

<llo_original>
// kernel: tpu_custom_call.1
$region0: #{tpu_custom_call.1}
  #allocation0 [shape = 'u32[]', space=smem, size = 0x4, offset = 0x4, fixed_abs, tag = 'smem constant byte address 0x4 - core index']
  #allocation1 [shape = 'u32[144,128]{1,0:T(1,128)}', space=vmem, size = 0x12000, scoped, tag = 'internal scratch']
  %s0 = inlined_call_operand.vmem [shape: f32[2,8,32], index: 0, kind: input, shape index: {}]
  %s1 = inlined_call_operand.vmem [shape: f32[3,32,16], index: 1, kind: input, shape index: {}]
  %s2 = inlined_call_operand.hbm [shape: f32[2,8,16], index: 2, kind: output, shape index: {}]
  %s3 = sld [smem:[#allocation0]]
  $region41: #{tpu_custom_call.1} parent=0
    _
  %s5 = ssub.s32 1, %s3
  %s6 = scalar_select 0, %s5, %s3
  $region1: #{tpu_custom_call.1} parent=0
    #allocation2 [shape = 'u8[8192]{0}', space=vmem, size = 0x2000, scoped, tag = 'output window, operand 0']
    #allocation3 [shape = 's32[2]{0}', space=sflag, size = 0x8, scoped, tag = 'scoped memory for tpu_custom_call.1']
    %7 = vsyncpa [#allocation3], 0
    %s8 = scalar_lea.sflag [#allocation3], 1
    %9 = vsyncpa %s8, 0
    loop: start=0, step=1, limit=4
    $region2: #{tpu_custom_call.1} parent=1 // loop_pre_header
      _
    $region3: #{tpu_custom_call.1} parent=1 // loop_header
      %s11 = sphi 0, %s15
      %p12 = scmp.ge.s32.totalorder %s11, 4
      %s21 = sphi 0, %s23
      %s24 = sphi 0, %s21
      %s25 = sphi 0, %s24
      %s41 = sphi 0, %s25
      %s45 = sphi 0, %s45
      %s47 = sphi 0, %s45
      %s48 = sphi 0, %s47
      %s62 = sphi 0, %s48
      %s68 = sphi 0, %s70
      %s71 = sphi 0, %s68
      %s72 = sphi 0, %s71
      %s88 = sphi 0, %s72
    $region4: #{tpu_custom_call.1} parent=1 // loop_header_branch
      %14 = sbr.rel (%p12) target = $region8
    $region5: #{tpu_custom_call.1} parent=1 // loop_body
      %s16 = ssub.s32 %s11, 1
      %s17 = ssub.s32 %s11, 2
      %s18 = sadd.s32 %s11, 1
      %s19 = ssub.s32 %s11, %s18
      %p20 = scmp.eq.s32.totalorder %s19, 0
      %s22 = sadd.s32 %s21, 1
      %s23 = scalar_select %p20, %s21, %s22
      %p26 = pneg %p20
      %p27 = scmp.eq.s32.totalorder %s11, 1
      %p28 = por %p26, %p27
      %p29 = scmp.ne.s32.totalorder %s21, %s24
      %p30 = scmp.eq.s32.totalorder %s11, 0
      %p31 = por %p29, %p30
      %p32 = scmp.ne.s32.totalorder %s21, %s24
      %p33 = scmp.eq.s32.totalorder %s16, 1
      %p34 = por %p32, %p33
      %p35 = scmp.ne.s32.totalorder %s24, %s25
      %p36 = scmp.eq.s32.totalorder %s16, 0
      %p37 = por %p35, %p36
      %p38 = scmp.ne.s32.totalorder %s24, %s25
      %p39 = scmp.eq.s32.totalorder %s17, 1
      %p40 = por %p38, %p39
      %p42 = scmp.ne.s32.totalorder %s25, %s41
      %p43 = scmp.eq.s32.totalorder %s17, 0
      %p44 = por %p42, %p43
      %s46 = sadd.s32 %s45, 1
      %p49 = scmp.eq.s32.totalorder %s11, 1
      %p50 = scmp.ne.s32.totalorder %s45, %s47
      %p51 = scmp.eq.s32.totalorder %s11, 0
      %p52 = por %p50, %p51
      %p53 = scmp.ne.s32.totalorder %s45, %s47
      %p54 = scmp.eq.s32.totalorder %s16, 1
      %p55 = por %p53, %p54
      %p56 = scmp.ne.s32.totalorder %s47, %s48
      %p57 = scmp.eq.s32.totalorder %s16, 0
      %p58 = por %p56, %p57
      %p59 = scmp.ne.s32.totalorder %s47, %s48
      %p60 = scmp.eq.s32.totalorder %s17, 1
      %p61 = por %p59, %p60
      %p63 = scmp.ne.s32.totalorder %s48, %s62
      %p64 = scmp.eq.s32.totalorder %s17, 0
      %p65 = por %p63, %p64
      %s66 = ssub.s32 %s11, %s18
      %p67 = scmp.eq.s32.totalorder %s66, 0
      %s69 = sadd.s32 %s68, 1
      %s70 = scalar_select %p67, %s68, %s69
      %p73 = pneg %p67
      %p74 = scmp.eq.s32.totalorder %s11, 1
      %p75 = por %p73, %p74
      %p76 = scmp.ne.s32.totalorder %s68, %s71
      %p77 = scmp.eq.s32.totalorder %s11, 0
      %p78 = por %p76, %p77
      %p79 = scmp.ne.s32.totalorder %s68, %s71
      %p80 = scmp.eq.s32.totalorder %s16, 1
      %p81 = por %p79, %p80
      %p82 = scmp.ne.s32.totalorder %s71, %s72
      %p83 = scmp.eq.s32.totalorder %s16, 0
      %p84 = por %p82, %p83
      %p85 = scmp.ne.s32.totalorder %s71, %s72
      %p86 = scmp.eq.s32.totalorder %s17, 1
      %p87 = por %p85, %p86
      %p89 = scmp.ne.s32.totalorder %s72, %s88
      %p90 = scmp.eq.s32.totalorder %s17, 0
      %p91 = por %p89, %p90
      %p92 = scmp.le.s32.totalorder 1, %s11
      %p93 = scmp.lt.s32.totalorder %s11, 3
      %p94 = pnand %p92, %p93
      %p95 = pneg %p94
      // Predicated region
      $region9: #{tpu_custom_call.1} parent=5 // pred_check
        _
      $region10: #{tpu_custom_call.1} parent=5 // pred_check_branch
        %97 = sbr.rel (%p94) target = $region12
      $region11: #{tpu_custom_call.1} parent=5 // pred_region
        %s98 = ssub.s32 %s11, 1
        // Predicated region
        $region13: #{tpu_custom_call.1} parent=11 // pred_check
          %p99 = pneg %p58
        $region14: #{tpu_custom_call.1} parent=11 // pred_check_branch
          %101 = sbr.rel (%p99) target = $region16
        $region15: #{tpu_custom_call.1} parent=11 // pred_region
          _
        $region16: #{tpu_custom_call.1} parent=11 // pred_fallthru
          _
      $region12: #{tpu_custom_call.1} parent=5 // pred_fallthru
        _
      %p102 = scmp.lt.s32.totalorder %s11, 2
      // Predicated region
      $region17: #{tpu_custom_call.1} parent=5 // pred_check
        %p103 = pneg %p102
      $region18: #{tpu_custom_call.1} parent=5 // pred_check_branch
        %105 = sbr.rel (%p103) target = $region20
      $region19: #{tpu_custom_call.1} parent=5 // pred_region
        // Predicated region
        $region21: #{tpu_custom_call.1} parent=19 // pred_check
          %p106 = pneg %p31
        $region22: #{tpu_custom_call.1} parent=19 // pred_check_branch
          %108 = sbr.rel (%p106) target = $region24
        $region23: #{tpu_custom_call.1} parent=19 // pred_region
          %p109 = scmp.lt.s32.totalorder %s11, 1
          %s110 = scalar_select %p109, %s11, 1
          %s111 = smul.addr %s110, 8
          %s112 = scalar_lea.vmem %s0, %s111
        $region24: #{tpu_custom_call.1} parent=19 // pred_fallthru
          _
      $region20: #{tpu_custom_call.1} parent=5 // pred_fallthru
        _
      %p113 = scmp.le.s32.totalorder 1, %s11
      %p114 = scmp.lt.s32.totalorder %s11, 3
      %p115 = pnand %p113, %p114
      %p116 = pneg %p115
      // Predicated region
      $region25: #{tpu_custom_call.1} parent=5 // pred_check
        _
      $region26: #{tpu_custom_call.1} parent=5 // pred_check_branch
        %118 = sbr.rel (%p115) target = $region28
      $region27: #{tpu_custom_call.1} parent=5 // pred_region
        %s119 = ssub.s32 %s11, 1
        %p120 = scmp.lt.s32.totalorder %s16, 1
        %s121 = scalar_select %p120, %s16, 1
        %s122 = smul.addr %s121, 8
        %s123 = scalar_lea.vmem %s0, %s122
        %p124 = pneg %p37
        %p125 = pneg %p34
        %p126 = pneg %p58
        %p127 = pneg %p55
        %p128 = pneg %p84
        %p129 = pneg %p81
        %s130 = sand.u32 %s71, 1
        %s131 = scalar_lea.sflag [#allocation3], %s130
        %s132 = sand.u32 %s71, 1
        %s133 = smul.addr %s132, 8
        %s134 = scalar_lea.vmem [#allocation2], %s133
        %p135 = scmp.lt.s32.totalorder %s16, 1
        %s136 = scalar_select %p135, %s16, 1
        %s137 = smul.addr %s136, 8
        %s138 = scalar_lea.vmem %s0, %s137
        %v140 = vld [vmem:[%s138] sm:$0xff]
        %v141 = vpack.c.bf16 %v140, %v140
        %v142 = vld [vmem:[%s1] sm:$0xff]
        %v143 = vld [vmem:[%s1 + $0x8] sm:$0xff]
        %v144 = vld [vmem:[%s1 + $0x10] sm:$0xff]
        %v145 = vld [vmem:[%s1 + $0x18] sm:$0xff]
        %v146 = vpack.c.bf16 %v143, %v142
        %v147 = vpack.c.bf16 %v145, %v144
        %vm148 = vcmask 261120
        %v150 = vsel %vm148, %v141, 0
        %152 = vmatprep.subr.bf16.mxu0 0
        %153 = vmatpush1.bf16.msra.mxu0 %v146
        %154 = vmatprep.subr.bf16.mxu0 0
        %155 = vmatpush1.bf16.msra.mxu0 %v147
        %156 = vmatprep.subr.bf16.mxu0 0
        %157 = vmatpush1.bf16.msra.mxu0 0
        %158 = vmatprep.subr.bf16.mxu0 0
        %159 = vmatpush1.bf16.msra.mxu0 0
        %160 = vmatprep.subr.bf16.mxu0 0
        %161 = vmatpush1.bf16.msra.mxu0 0
        %162 = vmatprep.subr.bf16.mxu0 0
        %163 = vmatpush1.bf16.msra.mxu0 0
        %164 = vmatprep.subr.bf16.mxu0 0
        %165 = vmatpush1.bf16.msra.mxu0 0
        %166 = vmatprep.subr.bf16.mxu0 0
        %167 = vmatpush1.bf16.msra.mxu0 0
        %168 = vmatprep.subr.bf16.mxu0 0
        %169 = vmatpush1.bf16.msra.mxu0 0
        %170 = vmatprep.subr.bf16.mxu0 0
        %171 = vmatpush1.bf16.msra.mxu0 0
        %172 = vmatprep.subr.bf16.mxu0 0
        %173 = vmatpush1.bf16.msra.mxu0 0
        %174 = vmatprep.subr.bf16.mxu0 0
        %175 = vmatpush1.bf16.msra.mxu0 0
        %176 = vmatprep.subr.bf16.mxu0 0
        %177 = vmatpush1.bf16.msra.mxu0 0
        %178 = vmatprep.subr.bf16.mxu0 0
        %179 = vmatpush1.bf16.msra.mxu0 0
        %180 = vmatprep.subr.bf16.mxu0 0
        %181 = vmatpush1.bf16.msra.mxu0 0
        %182 = vmatprep.subr.bf16.mxu0 0
        %183 = vmatpush1.bf16.msra.mxu0 0
        %184 = vmatprep.mubr.bf16.mxu0 0
        %185 = vmatmul.mubr.bf16.gmra.mrb[0].mxu0 %v150
        %v186 = vpop.f32.mrb[0].mxu0
        %v187 = vadd.f32 0.0, %v186
        %v188 = vpop.f32.mrb[0].mxu0
        %v189 = vpop.f32.mrb[0].mxu0
        %v190 = vpop.f32.mrb[0].mxu0
        %191 = vdwg.mxu0
        %s192 = scalar_lea.vmem %s1, 32
        %v193 = vld [vmem:[%s192] sm:$0xff]
        %v194 = vld [vmem:[%s192 + $0x8] sm:$0xff]
        %v195 = vld [vmem:[%s192 + $0x10] sm:$0xff]
        %v196 = vld [vmem:[%s192 + $0x18] sm:$0xff]
        %v197 = vpack.c.bf16 %v194, %v193
        %v198 = vpack.c.bf16 %v196, %v195
        %199 = vmatprep.subr.bf16.mxu0 0
        %200 = vmatpush1.bf16.msra.mxu0 %v197
        %201 = vmatprep.subr.bf16.mxu0 0
        %202 = vmatpush1.bf16.msra.mxu0 %v198
        %203 = vmatprep.subr.bf16.mxu0 0
        %204 = vmatpush1.bf16.msra.mxu0 0
        %205 = vmatprep.subr.bf16.mxu0 0
        %206 = vmatpush1.bf16.msra.mxu0 0
        %207 = vmatprep.subr.bf16.mxu0 0
        %208 = vmatpush1.bf16.msra.mxu0 0
        %209 = vmatprep.subr.bf16.mxu0 0
        %210 = vmatpush1.bf16.msra.mxu0 0
        %211 = vmatprep.subr.bf16.mxu0 0
        %212 = vmatpush1.bf16.msra.mxu0 0
        %213 = vmatprep.subr.bf16.mxu0 0
        %214 = vmatpush1.bf16.msra.mxu0 0
        %215 = vmatprep.subr.bf16.mxu0 0
        %216 = vmatpush1.bf16.msra.mxu0 0
        %217 = vmatprep.subr.bf16.mxu0 0
        %218 = vmatpush1.bf16.msra.mxu0 0
        %219 = vmatprep.subr.bf16.mxu0 0
        %220 = vmatpush1.bf16.msra.mxu0 0
        %221 = vmatprep.subr.bf16.mxu0 0
        %222 = vmatpush1.bf16.msra.mxu0 0
        %223 = vmatprep.subr.bf16.mxu0 0
        %224 = vmatpush1.bf16.msra.mxu0 0
        %225 = vmatprep.subr.bf16.mxu0 0
        %226 = vmatpush1.bf16.msra.mxu0 0
        %227 = vmatprep.subr.bf16.mxu0 0
        %228 = vmatpush1.bf16.msra.mxu0 0
        %229 = vmatprep.subr.bf16.mxu0 0
        %230 = vmatpush1.bf16.msra.mxu0 0
        %231 = vmatprep.mubr.bf16.mxu0 0
        %232 = vmatmul.mubr.bf16.gmra.mrb[0].mxu0 %v150
        %v233 = vpop.f32.mrb[0].mxu0
        %v234 = vadd.f32 0.0, %v233
        %v235 = vpop.f32.mrb[0].mxu0
        %v236 = vpop.f32.mrb[0].mxu0
        %v237 = vpop.f32.mrb[0].mxu0
        %238 = vdwg.mxu0
        %s239 = scalar_lea.vmem %s1, 64
        %v240 = vld [vmem:[%s239] sm:$0xff]
        %v241 = vld [vmem:[%s239 + $0x8] sm:$0xff]
        %v242 = vld [vmem:[%s239 + $0x10] sm:$0xff]
        %v243 = vld [vmem:[%s239 + $0x18] sm:$0xff]
        %v244 = vpack.c.bf16 %v241, %v240
        %v245 = vpack.c.bf16 %v243, %v242
        %246 = vmatprep.subr.bf16.mxu0 0
        %247 = vmatpush1.bf16.msra.mxu0 %v244
        %248 = vmatprep.subr.bf16.mxu0 0
        %249 = vmatpush1.bf16.msra.mxu0 %v245
        %250 = vmatprep.subr.bf16.mxu0 0
        %251 = vmatpush1.bf16.msra.mxu0 0
        %252 = vmatprep.subr.bf16.mxu0 0
        %253 = vmatpush1.bf16.msra.mxu0 0
        %254 = vmatprep.subr.bf16.mxu0 0
        %255 = vmatpush1.bf16.msra.mxu0 0
        %256 = vmatprep.subr.bf16.mxu0 0
        %257 = vmatpush1.bf16.msra.mxu0 0
        %258 = vmatprep.subr.bf16.mxu0 0
        %259 = vmatpush1.bf16.msra.mxu0 0
        %260 = vmatprep.subr.bf16.mxu0 0
        %261 = vmatpush1.bf16.msra.mxu0 0
        %262 = vmatprep.subr.bf16.mxu0 0
        %263 = vmatpush1.bf16.msra.mxu0 0
        %264 = vmatprep.subr.bf16.mxu0 0
        %265 = vmatpush1.bf16.msra.mxu0 0
        %266 = vmatprep.subr.bf16.mxu0 0
        %267 = vmatpush1.bf16.msra.mxu0 0
        %268 = vmatprep.subr.bf16.mxu0 0
        %269 = vmatpush1.bf16.msra.mxu0 0
        %270 = vmatprep.subr.bf16.mxu0 0
        %271 = vmatpush1.bf16.msra.mxu0 0
        %272 = vmatprep.subr.bf16.mxu0 0
        %273 = vmatpush1.bf16.msra.mxu0 0
        %274 = vmatprep.subr.bf16.mxu0 0
        %275 = vmatpush1.bf16.msra.mxu0 0
        %276 = vmatprep.subr.bf16.mxu0 0
        %277 = vmatpush1.bf16.msra.mxu0 0
        %278 = vmatprep.mubr.bf16.mxu0 0
        %279 = vmatmul.mubr.bf16.gmra.mrb[0].mxu0 %v150
        %v280 = vpop.f32.mrb[0].mxu0
        %v281 = vadd.f32 0.0, %v280
        %v282 = vpop.f32.mrb[0].mxu0
        %v283 = vpop.f32.mrb[0].mxu0
        %v284 = vpop.f32.mrb[0].mxu0
        %285 = vdwg.mxu0
        %v286 = vpack.c.bf16 %v187, %v187
        %v287 = vmul.f32 %v234, 0.17677669
        %v288 = vpack.c.bf16 %v287, %v287
        %v289 = vpack.c.bf16 %v281, %v281
        %vm290 = vcmask 130048
        %v292 = vsel %vm290, %v288, 0
        %v295 = vsel %vm290, %v286, 0
        %297 = vmatprep.subr.bf16.mxu0 0
        %298 = vmatpush1.bf16.xpose.msra.mxu0 %v295
        %299 = vmatprep.subr.bf16.mxu0 0
        %300 = vmatpush1.bf16.xpose.msra.mxu0 0
        %301 = vmatprep.subr.bf16.mxu0 0
        %302 = vmatpush1.bf16.xpose.msra.mxu0 0
        %303 = vmatprep.subr.bf16.mxu0 0
        %304 = vmatpush1.bf16.xpose.msra.mxu0 0
        %305 = vmatprep.subr.bf16.mxu0 0
        %306 = vmatpush1.bf16.xpose.msra.mxu0 0
        %307 = vmatprep.subr.bf16.mxu0 0
        %308 = vmatpush1.bf16.xpose.msra.mxu0 0
        %309 = vmatprep.subr.bf16.mxu0 0
        %310 = vmatpush1.bf16.xpose.msra.mxu0 0
        %311 = vmatprep.subr.bf16.mxu0 0
        %312 = vmatpush1.bf16.xpose.msra.mxu0 0
        %313 = vmatprep.subr.bf16.mxu0 0
        %314 = vmatpush1.bf16.xpose.msra.mxu0 0
        %315 = vmatprep.subr.bf16.mxu0 0
        %316 = vmatpush1.bf16.xpose.msra.mxu0 0
        %317 = vmatprep.subr.bf16.mxu0 0
        %318 = vmatpush1.bf16.xpose.msra.mxu0 0
        %319 = vmatprep.subr.bf16.mxu0 0
        %320 = vmatpush1.bf16.xpose.msra.mxu0 0
        %321 = vmatprep.subr.bf16.mxu0 0
        %322 = vmatpush1.bf16.xpose.msra.mxu0 0
        %323 = vmatprep.subr.bf16.mxu0 0
        %324 = vmatpush1.bf16.xpose.msra.mxu0 0
        %325 = vmatprep.subr.bf16.mxu0 0
        %326 = vmatpush1.bf16.xpose.msra.mxu0 0
        %327 = vmatprep.subr.bf16.mxu0 0
        %328 = vmatpush1.bf16.xpose.msra.mxu0 0
        %329 = vmatprep.mubr.bf16.mxu0 0
        %330 = vmatmul.mubr.bf16.gmra.mrb[0].mxu0 %v292
        %v331 = vpop.f32.mrb[0].mxu0
        %v332 = vadd.f32 0.0, %v331
        %v333 = vpop.f32.mrb[0].mxu0
        %v334 = vpop.f32.mrb[0].mxu0
        %v335 = vpop.f32.mrb[0].mxu0
        %336 = vdwg.mxu0
        %v337 = vlaneseq
        %v338 = vshrl.u32 %v337, 7
        %v339 = vlaneseq
        %v340 = vand.u32 %v339, 127
        %vm341 = vcmp.le.s32.totalorder %v340, %v338
        %v342 = vsel %vm341, %v332, -1e+30
        %vm343 = vcmask 64512
        %v344 = vsel %vm343, %v342, -inf
        %345 = vmax.xlane.f32.xlu0 %v344
        %v346 = vpop.xlane.xlu0 %345
        %v347 = vsub.f32 %v342, %v346
        %v348 = vmul.f32 %v347, 1.442695
        %v349 = vpow.pop %v348
        %v350 = vsel %vm343, %v349, 0.0
        %351 = vadd.xlane.f32.xlu0 %v350
        %v352 = vpop.xlane.xlu0 %351
        %v353 = vrcp.pop %v352
        %v354 = vmul.f32 %v349, %v353
        %v355 = vpack.c.bf16 %v354, %v354
        %v357 = vsel %vm343, %v355, 0
        %vm359 = vcmask 1043456
        %v361 = vsel %vm359, %v289, 0
        %363 = vmatprep.subr.bf16.mxu0 0
        %364 = vmatpush1.bf16.msra.mxu0 %v361
        %365 = vmatprep.subr.bf16.mxu0 0
        %366 = vmatpush1.bf16.msra.mxu0 0
        %367 = vmatprep.subr.bf16.mxu0 0
        %368 = vmatpush1.bf16.msra.mxu0 0
        %369 = vmatprep.subr.bf16.mxu0 0
        %370 = vmatpush1.bf16.msra.mxu0 0
        %371 = vmatprep.subr.bf16.mxu0 0
        %372 = vmatpush1.bf16.msra.mxu0 0
        %373 = vmatprep.subr.bf16.mxu0 0
        %374 = vmatpush1.bf16.msra.mxu0 0
        %375 = vmatprep.subr.bf16.mxu0 0
        %376 = vmatpush1.bf16.msra.mxu0 0
        %377 = vmatprep.subr.bf16.mxu0 0
        %378 = vmatpush1.bf16.msra.mxu0 0
        %379 = vmatprep.subr.bf16.mxu0 0
        %380 = vmatpush1.bf16.msra.mxu0 0
        %381 = vmatprep.subr.bf16.mxu0 0
        %382 = vmatpush1.bf16.msra.mxu0 0
        %383 = vmatprep.subr.bf16.mxu0 0
        %384 = vmatpush1.bf16.msra.mxu0 0
        %385 = vmatprep.subr.bf16.mxu0 0
        %386 = vmatpush1.bf16.msra.mxu0 0
        %387 = vmatprep.subr.bf16.mxu0 0
        %388 = vmatpush1.bf16.msra.mxu0 0
        %389 = vmatprep.subr.bf16.mxu0 0
        %390 = vmatpush1.bf16.msra.mxu0 0
        %391 = vmatprep.subr.bf16.mxu0 0
        %392 = vmatpush1.bf16.msra.mxu0 0
        %393 = vmatprep.subr.bf16.mxu0 0
        %394 = vmatpush1.bf16.msra.mxu0 0
        %395 = vmatprep.mubr.bf16.mxu0 0
        %396 = vmatmul.mubr.bf16.gmra.mrb[0].mxu0 %v357
        %v397 = vpop.f32.mrb[0].mxu0
        %v398 = vadd.f32 0.0, %v397
        %v399 = vpop.f32.mrb[0].mxu0
        %v400 = vpop.f32.mrb[0].mxu0
        %v401 = vpop.f32.mrb[0].mxu0
        %402 = vdwg.mxu0
        %403 = vst.msk [vmem:[%s134] sm:$0xff] %vm290, %v398
        %s404 = sand.u32 %s71, 1
        %s405 = scalar_lea.sflag [#allocation3], %s404
        %s406 = sand.u32 %s71, 1
        %s407 = smul.addr %s406, 8
        %s408 = scalar_lea.vmem [#allocation2], %s407
        // Predicated region
        $region29: #{tpu_custom_call.1} parent=27 // pred_check
          %p409 = pneg %p81
        $region30: #{tpu_custom_call.1} parent=27 // pred_check_branch
          %411 = sbr.rel (%p409) target = $region32
        $region31: #{tpu_custom_call.1} parent=27 // pred_region
          %s413 = ssub.s32 128, 128
          %414 = vsyncadd %s405, %s413
          %s415 = smul.addr %s16, 128
          %s416 = scalar_lea.hbm %s2, %s415
          %s418 = sshll.u32 %s408, 4
          %s419 = int_to_ptr.vmem [resolvable:$true] %s418
          %421 = dma.vmem_to_hbm [thread:$0]  %s419, 128, %s416, %s405
        $region32: #{tpu_custom_call.1} parent=27 // pred_fallthru
          _
      $region28: #{tpu_custom_call.1} parent=5 // pred_fallthru
        _
      %p422 = scmp.le.s32.totalorder 2, %s11
      // Predicated region
      $region33: #{tpu_custom_call.1} parent=5 // pred_check
        %p423 = pneg %p422
      $region34: #{tpu_custom_call.1} parent=5 // pred_check_branch
        %425 = sbr.rel (%p423) target = $region36
      $region35: #{tpu_custom_call.1} parent=5 // pred_region
        %s426 = ssub.s32 %s11, 2
        // Predicated region
        $region37: #{tpu_custom_call.1} parent=35 // pred_check
          %p427 = pneg %p87
        $region38: #{tpu_custom_call.1} parent=35 // pred_check_branch
          %429 = sbr.rel (%p427) target = $region40
        $region39: #{tpu_custom_call.1} parent=35 // pred_region
          %s430 = sand.u32 %s72, 1
          %s431 = scalar_lea.sflag [#allocation3], %s430
          %s432 = sand.u32 %s72, 1
          %s433 = smul.addr %s432, 8
          %s434 = scalar_lea.vmem [#allocation2], %s433
          %435 = dma.done %s431, 128
        $region40: #{tpu_custom_call.1} parent=35 // pred_fallthru
          _
      $region36: #{tpu_custom_call.1} parent=5 // pred_fallthru
        _
    $region6: #{tpu_custom_call.1} parent=1 // loop_footer
      %s15 = sadd.s32 1, %s11
    $region7: #{tpu_custom_call.1} parent=1 // loop_footer_branch
      %10 = sbr.rel target = $region3
    $region8: #{tpu_custom_call.1} parent=1 // loop_exit
      _
    %436 = vsyncpa [#allocation3], 1
    %s437 = scalar_lea.sflag [#allocation3], 1
    %438 = vsyncpa %s437, 1

</llo_original>
